<compile_context>
chip_gen: v5e
topology: v5e:2x2
jax: 0.10.0
libtpu: 0.0.40
codegen_flags: <defaults>
</compile_context>

<pallas_src>
import jax
import jax.numpy as jnp
from jax.experimental import pallas as pl
from jax.experimental.pallas import tpu as pltpu

_IN = 2     # fc1 in features
_H1 = 6     # fc1 out features
_OUT = 3    # fc3 out features

# Packed scalar-parameter layout (single (39,) f32 SMEM array):
_W1_OFF = 0                       # w1s[k, j] at k*_H1 + j            (12 values)
_B1_OFF = _IN * _H1               # b1s[j]                            (6 values)
_W23_OFF = _B1_OFF + _H1          # w23s[k, j] at _W23_OFF + k*_OUT+j (18 values)
_B23_OFF = _W23_OFF + _H1 * _OUT  # b23s[j]                           (3 values)
_N_PARAMS = _B23_OFF + _OUT       # 39

_TR_MAX = 2048   # max tile rows: 2048 * 128 = 262,144 batch elements per tile


def mlp_kernel(p_ref, x_ref, o_ref):
    # p_ref: (39,) f32 in SMEM (scalar weights, resident across the grid)
    # x_ref: (_IN, TR, 128) VMEM tile, batch dense on sublanes + lanes
    # o_ref: (_OUT, TR, 128) VMEM tile
    f0 = x_ref[0].astype(jnp.float32)      # feature 0 plane, (TR, 128)
    f1 = x_ref[1].astype(jnp.float32)      # feature 1 plane, (TR, 128)

    # fc1 (0.5 folded into w1s/b1s) followed by tanh (EUP slot):
    #   t_j = tanh(w1s[0,j]*f0 + w1s[1,j]*f1 + b1s[j])
    t = []
    for j in range(_H1):
        z = (p_ref[_W1_OFF + j] * f0
             + p_ref[_W1_OFF + _H1 + j] * f1
             + p_ref[_B1_OFF + j])
        t.append(jnp.tanh(z))

    # fused fc2 @ fc3 (sigmoid affine folded into w23s / b23s):
    #   out_j = sum_k t_k * w23s[k, j] + b23s[j]
    for j in range(_OUT):
        acc = t[0] * p_ref[_W23_OFF + j]
        for k in range(1, _H1):
            acc = acc + t[k] * p_ref[_W23_OFF + k * _OUT + j]
        o_ref[j] = (acc + p_ref[_B23_OFF + j]).astype(o_ref.dtype)


def pack_params(params):
    """Fuse fc2/fc3, fold the tanh-form sigmoid constants, pack to (39,) f32.

    Call once (outside the per-step path); the result is what `net_apply` takes.
    """
    w1, b1 = params["w1"], params["b1"]   # (2, 6), (6,)
    w2, b2 = params["w2"], params["b2"]   # (6, 6), (6,)
    w3, b3 = params["w3"], params["b3"]   # (6, 3), (3,)
    w23 = w2 @ w3                         # (6, 3)  exact (no activation between)
    b23 = b2 @ w3 + b3                    # (3,)
    # sigmoid(z) = 0.5*tanh(0.5*z) + 0.5 ; fold the constants into the weights
    # so the kernel computes  out = tanh(x@w1s + b1s) @ w23s + b23s.
    w1s = 0.5 * w1
    b1s = 0.5 * b1
    w23s = 0.5 * w23
    b23s = b23 + 0.5 * jnp.sum(w23, axis=0)
    packed = jnp.concatenate(
        [w1s.reshape(-1), b1s.reshape(-1), w23s.reshape(-1), b23s.reshape(-1)]
    ).astype(jnp.float32)
    assert packed.shape == (_N_PARAMS,)
    return packed


def _choose_tile_rows(r):
    """Pick the batch tile (in rows of 128 lanes).

    Aim for >= 8 grid steps on large batches (keeps both v7x TCs busy and the
    DMA pipeline full), but keep tiles >= 512 rows (~1.3 MiB of x+out traffic)
    so the ~0.35 us per-step overhead stays small, and cap at _TR_MAX so the
    double-buffered footprint (~10 MiB) fits the scoped VMEM budget on all
    generations (v5e 16 MiB default, v6e 32 MiB, v7x 64 MiB physical / TC).
    """
    tr = min(max(512, pl.cdiv(r, 8)), _TR_MAX, r)
    if tr < r:
        tr -= tr % 8          # block sublane dim must be a multiple of 8
    return max(tr, 1)


@jax.jit
def net_apply(x, packed):
    """x: (B, 2); packed: (39,) from pack_params(). Returns (B, 3)."""
    assert x.ndim == 2 and x.shape[1] == _IN
    b = x.shape[0]
    bp = pl.cdiv(b, 128) * 128            # pad to lane multiple (for the reshape)
    r = bp // 128

    xt = x.T                               # (2, B); fused with pad+reshape by XLA
    if bp != b:
        xt = jnp.pad(xt, ((0, 0), (0, bp - b)))
    x3 = xt.reshape(_IN, r, 128)           # feature-major, sublane+lane dense

    tr = _choose_tile_rows(r)
    grid = (pl.cdiv(r, tr),)               # ragged last block is fine

    out3 = pl.pallas_call(
        mlp_kernel,
        out_shape=jax.ShapeDtypeStruct((_OUT, r, 128), x.dtype),
        grid=grid,
        in_specs=[
            pl.BlockSpec(memory_space=pltpu.MemorySpace.SMEM),   # 39 scalars
            pl.BlockSpec((_IN, tr, 128), lambda i: (0, i, 0)),   # x tile
        ],
        out_specs=pl.BlockSpec((_OUT, tr, 128), lambda i: (0, i, 0)),
        compiler_params=pltpu.CompilerParams(
            dimension_semantics=("parallel",),       # v7x: shard over both TCs
            vmem_limit_bytes=32 * 1024 * 1024,       # explicit, safe on all gens
        ),
    )(packed, x3)

    return out3.reshape(_OUT, bp)[:, :b].T           # back to (B, 3)


def net_forward(x, params):
    """Convenience wrapper matching PyTorch Net.forward; prefer packing once."""
    return net_apply(x, pack_params(params))


def init_params(key):
    """Mimics nn.Linear's uniform(-1/sqrt(fan_in), 1/sqrt(fan_in)) init.
    Weights stored as (in, out) — transpose of PyTorch's (out, in)."""
    def linear(key, fan_in, fan_out):
        kw, kb = jax.random.split(key)
        bound = 1.0 / jnp.sqrt(fan_in)
        w = jax.random.uniform(kw, (fan_in, fan_out), jnp.float32, -bound, bound)
        b = jax.random.uniform(kb, (fan_out,), jnp.float32, -bound, bound)
        return w, b

    k1, k2, k3 = jax.random.split(key, 3)
    w1, b1 = linear(k1, _IN, _H1)
    w2, b2 = linear(k2, _H1, _H1)
    w3, b3 = linear(k3, _H1, _OUT)
    return {"w1": w1, "b1": b1, "w2": w2, "b2": b2, "w3": w3, "b3": b3}


def reference_forward(x, p):
    h = jax.nn.sigmoid(x @ p["w1"] + p["b1"])
    h = h @ p["w2"] + p["b2"]
    return h @ p["w3"] + p["b3"]


if __name__ == "__main__":
    key = jax.random.PRNGKey(0)
    k_in, k_params = jax.random.split(key)

    B = 8
    x = jax.random.normal(k_in, (B, _IN), dtype=jnp.float32)
    params = init_params(k_params)

    packed = pack_params(params)          # packed once, outside the call path
    out = net_apply(x, packed)
    out = jax.block_until_ready(out)

    ref = reference_forward(x, params)
    assert out.shape == (B, _OUT), out.shape
    assert jnp.allclose(out, ref, atol=1e-5, rtol=1e-5), (out, ref)

    print("KERNEL_OK")
</pallas_src>

<mosaic_0001>
module attributes {stable_mosaic.version = 11 : i64} {
  func.func @mlp_kernel(%arg0: i32, %arg1: memref<39xf32, #tpu.memory_space<smem>>, %arg2: memref<2x1x128xf32, #tpu.memory_space<vmem>>, %arg3: memref<3x1x128xf32, #tpu.memory_space<vmem>>) attributes {dimension_semantics = [#tpu.dimension_semantics<parallel>], iteration_bounds = array<i64: 1>, scalar_prefetch = 0 : i64, scratch_operands = 0 : i64, tpu.core_type = #tpu.core_type<tc>, window_params = [{transform_indices = @transform_0, window_bounds = array<i64: 39>}, {transform_indices = @transform_1, window_bounds = array<i64: 2, 1, 128>}, {transform_indices = @transform_2, window_bounds = array<i64: 3, 1, 128>}]} {
    %c0 = arith.constant 0 : index
    %c0_0 = arith.constant 0 : index
    %c0_1 = arith.constant 0 : index
    %0 = vector.load %arg2[%c0, %c0_0, %c0_1] : memref<2x1x128xf32, #tpu.memory_space<vmem>>, vector<1x1x128xf32>
    %1 = vector.shape_cast %0 : vector<1x1x128xf32> to vector<1x128xf32>
    %c1 = arith.constant 1 : index
    %c0_2 = arith.constant 0 : index
    %c0_3 = arith.constant 0 : index
    %2 = vector.load %arg2[%c1, %c0_2, %c0_3] : memref<2x1x128xf32, #tpu.memory_space<vmem>>, vector<1x1x128xf32>
    %3 = vector.shape_cast %2 : vector<1x1x128xf32> to vector<1x128xf32>
    %c0_4 = arith.constant 0 : index
    %4 = memref.load %arg1[%c0_4] : memref<39xf32, #tpu.memory_space<smem>>
    %5 = vector.broadcast %4 : f32 to vector<1x128xf32>
    %6 = arith.mulf %5, %1 : vector<1x128xf32>
    %c6 = arith.constant 6 : index
    %7 = memref.load %arg1[%c6] : memref<39xf32, #tpu.memory_space<smem>>
    %8 = vector.broadcast %7 : f32 to vector<1x128xf32>
    %9 = arith.mulf %8, %3 : vector<1x128xf32>
    %10 = arith.addf %6, %9 : vector<1x128xf32>
    %c12 = arith.constant 12 : index
    %11 = memref.load %arg1[%c12] : memref<39xf32, #tpu.memory_space<smem>>
    %12 = vector.broadcast %11 : f32 to vector<1x128xf32>
    %13 = arith.addf %10, %12 : vector<1x128xf32>
    %14 = math.tanh %13 : vector<1x128xf32>
    %c1_5 = arith.constant 1 : index
    %15 = memref.load %arg1[%c1_5] : memref<39xf32, #tpu.memory_space<smem>>
    %16 = vector.broadcast %15 : f32 to vector<1x128xf32>
    %17 = arith.mulf %16, %1 : vector<1x128xf32>
    %c7 = arith.constant 7 : index
    %18 = memref.load %arg1[%c7] : memref<39xf32, #tpu.memory_space<smem>>
    %19 = vector.broadcast %18 : f32 to vector<1x128xf32>
    %20 = arith.mulf %19, %3 : vector<1x128xf32>
    %21 = arith.addf %17, %20 : vector<1x128xf32>
    %c13 = arith.constant 13 : index
    %22 = memref.load %arg1[%c13] : memref<39xf32, #tpu.memory_space<smem>>
    %23 = vector.broadcast %22 : f32 to vector<1x128xf32>
    %24 = arith.addf %21, %23 : vector<1x128xf32>
    %25 = math.tanh %24 : vector<1x128xf32>
    %c2 = arith.constant 2 : index
    %26 = memref.load %arg1[%c2] : memref<39xf32, #tpu.memory_space<smem>>
    %27 = vector.broadcast %26 : f32 to vector<1x128xf32>
    %28 = arith.mulf %27, %1 : vector<1x128xf32>
    %c8 = arith.constant 8 : index
    %29 = memref.load %arg1[%c8] : memref<39xf32, #tpu.memory_space<smem>>
    %30 = vector.broadcast %29 : f32 to vector<1x128xf32>
    %31 = arith.mulf %30, %3 : vector<1x128xf32>
    %32 = arith.addf %28, %31 : vector<1x128xf32>
    %c14 = arith.constant 14 : index
    %33 = memref.load %arg1[%c14] : memref<39xf32, #tpu.memory_space<smem>>
    %34 = vector.broadcast %33 : f32 to vector<1x128xf32>
    %35 = arith.addf %32, %34 : vector<1x128xf32>
    %36 = math.tanh %35 : vector<1x128xf32>
    %c3 = arith.constant 3 : index
    %37 = memref.load %arg1[%c3] : memref<39xf32, #tpu.memory_space<smem>>
    %38 = vector.broadcast %37 : f32 to vector<1x128xf32>
    %39 = arith.mulf %38, %1 : vector<1x128xf32>
    %c9 = arith.constant 9 : index
    %40 = memref.load %arg1[%c9] : memref<39xf32, #tpu.memory_space<smem>>
    %41 = vector.broadcast %40 : f32 to vector<1x128xf32>
    %42 = arith.mulf %41, %3 : vector<1x128xf32>
    %43 = arith.addf %39, %42 : vector<1x128xf32>
    %c15 = arith.constant 15 : index
    %44 = memref.load %arg1[%c15] : memref<39xf32, #tpu.memory_space<smem>>
    %45 = vector.broadcast %44 : f32 to vector<1x128xf32>
    %46 = arith.addf %43, %45 : vector<1x128xf32>
    %47 = math.tanh %46 : vector<1x128xf32>
    %c4 = arith.constant 4 : index
    %48 = memref.load %arg1[%c4] : memref<39xf32, #tpu.memory_space<smem>>
    %49 = vector.broadcast %48 : f32 to vector<1x128xf32>
    %50 = arith.mulf %49, %1 : vector<1x128xf32>
    %c10 = arith.constant 10 : index
    %51 = memref.load %arg1[%c10] : memref<39xf32, #tpu.memory_space<smem>>
    %52 = vector.broadcast %51 : f32 to vector<1x128xf32>
    %53 = arith.mulf %52, %3 : vector<1x128xf32>
    %54 = arith.addf %50, %53 : vector<1x128xf32>
    %c16 = arith.constant 16 : index
    %55 = memref.load %arg1[%c16] : memref<39xf32, #tpu.memory_space<smem>>
    %56 = vector.broadcast %55 : f32 to vector<1x128xf32>
    %57 = arith.addf %54, %56 : vector<1x128xf32>
    %58 = math.tanh %57 : vector<1x128xf32>
    %c5 = arith.constant 5 : index
    %59 = memref.load %arg1[%c5] : memref<39xf32, #tpu.memory_space<smem>>
    %60 = vector.broadcast %59 : f32 to vector<1x128xf32>
    %61 = arith.mulf %60, %1 : vector<1x128xf32>
    %c11 = arith.constant 11 : index
    %62 = memref.load %arg1[%c11] : memref<39xf32, #tpu.memory_space<smem>>
    %63 = vector.broadcast %62 : f32 to vector<1x128xf32>
    %64 = arith.mulf %63, %3 : vector<1x128xf32>
    %65 = arith.addf %61, %64 : vector<1x128xf32>
    %c17 = arith.constant 17 : index
    %66 = memref.load %arg1[%c17] : memref<39xf32, #tpu.memory_space<smem>>
    %67 = vector.broadcast %66 : f32 to vector<1x128xf32>
    %68 = arith.addf %65, %67 : vector<1x128xf32>
    %69 = math.tanh %68 : vector<1x128xf32>
    %c18 = arith.constant 18 : index
    %70 = memref.load %arg1[%c18] : memref<39xf32, #tpu.memory_space<smem>>
    %71 = vector.broadcast %70 : f32 to vector<1x128xf32>
    %72 = arith.mulf %14, %71 : vector<1x128xf32>
    %c21 = arith.constant 21 : index
    %73 = memref.load %arg1[%c21] : memref<39xf32, #tpu.memory_space<smem>>
    %74 = vector.broadcast %73 : f32 to vector<1x128xf32>
    %75 = arith.mulf %25, %74 : vector<1x128xf32>
    %76 = arith.addf %72, %75 : vector<1x128xf32>
    %c24 = arith.constant 24 : index
    %77 = memref.load %arg1[%c24] : memref<39xf32, #tpu.memory_space<smem>>
    %78 = vector.broadcast %77 : f32 to vector<1x128xf32>
    %79 = arith.mulf %36, %78 : vector<1x128xf32>
    %80 = arith.addf %76, %79 : vector<1x128xf32>
    %c27 = arith.constant 27 : index
    %81 = memref.load %arg1[%c27] : memref<39xf32, #tpu.memory_space<smem>>
    %82 = vector.broadcast %81 : f32 to vector<1x128xf32>
    %83 = arith.mulf %47, %82 : vector<1x128xf32>
    %84 = arith.addf %80, %83 : vector<1x128xf32>
    %c30 = arith.constant 30 : index
    %85 = memref.load %arg1[%c30] : memref<39xf32, #tpu.memory_space<smem>>
    %86 = vector.broadcast %85 : f32 to vector<1x128xf32>
    %87 = arith.mulf %58, %86 : vector<1x128xf32>
    %88 = arith.addf %84, %87 : vector<1x128xf32>
    %c33 = arith.constant 33 : index
    %89 = memref.load %arg1[%c33] : memref<39xf32, #tpu.memory_space<smem>>
    %90 = vector.broadcast %89 : f32 to vector<1x128xf32>
    %91 = arith.mulf %69, %90 : vector<1x128xf32>
    %92 = arith.addf %88, %91 : vector<1x128xf32>
    %c36 = arith.constant 36 : index
    %93 = memref.load %arg1[%c36] : memref<39xf32, #tpu.memory_space<smem>>
    %94 = vector.broadcast %93 : f32 to vector<1x128xf32>
    %95 = arith.addf %92, %94 : vector<1x128xf32>
    %c0_6 = arith.constant 0 : index
    %c0_7 = arith.constant 0 : index
    %c0_8 = arith.constant 0 : index
    %96 = vector.load %arg3[%c0_6, %c0_7, %c0_8] : memref<3x1x128xf32, #tpu.memory_space<vmem>>, vector<1x1x128xf32>
    %97 = vector.shape_cast %96 : vector<1x1x128xf32> to vector<1x128xf32>
    %98 = vector.shape_cast %95 : vector<1x128xf32> to vector<1x1x128xf32>
    tpu.vector_store %arg3[%c0_6, %c0_7, %c0_8], %98 {strides = array<i32>} : memref<3x1x128xf32, #tpu.memory_space<vmem>>, vector<1x1x128xf32>,
    %c19 = arith.constant 19 : index
    %99 = memref.load %arg1[%c19] : memref<39xf32, #tpu.memory_space<smem>>
    %100 = vector.broadcast %99 : f32 to vector<1x128xf32>
    %101 = arith.mulf %14, %100 : vector<1x128xf32>
    %c22 = arith.constant 22 : index
    %102 = memref.load %arg1[%c22] : memref<39xf32, #tpu.memory_space<smem>>
    %103 = vector.broadcast %102 : f32 to vector<1x128xf32>
    %104 = arith.mulf %25, %103 : vector<1x128xf32>
    %105 = arith.addf %101, %104 : vector<1x128xf32>
    %c25 = arith.constant 25 : index
    %106 = memref.load %arg1[%c25] : memref<39xf32, #tpu.memory_space<smem>>
    %107 = vector.broadcast %106 : f32 to vector<1x128xf32>
    %108 = arith.mulf %36, %107 : vector<1x128xf32>
    %109 = arith.addf %105, %108 : vector<1x128xf32>
    %c28 = arith.constant 28 : index
    %110 = memref.load %arg1[%c28] : memref<39xf32, #tpu.memory_space<smem>>
    %111 = vector.broadcast %110 : f32 to vector<1x128xf32>
    %112 = arith.mulf %47, %111 : vector<1x128xf32>
    %113 = arith.addf %109, %112 : vector<1x128xf32>
    %c31 = arith.constant 31 : index
    %114 = memref.load %arg1[%c31] : memref<39xf32, #tpu.memory_space<smem>>
    %115 = vector.broadcast %114 : f32 to vector<1x128xf32>
    %116 = arith.mulf %58, %115 : vector<1x128xf32>
    %117 = arith.addf %113, %116 : vector<1x128xf32>
    %c34 = arith.constant 34 : index
    %118 = memref.load %arg1[%c34] : memref<39xf32, #tpu.memory_space<smem>>
    %119 = vector.broadcast %118 : f32 to vector<1x128xf32>
    %120 = arith.mulf %69, %119 : vector<1x128xf32>
    %121 = arith.addf %117, %120 : vector<1x128xf32>
    %c37 = arith.constant 37 : index
    %122 = memref.load %arg1[%c37] : memref<39xf32, #tpu.memory_space<smem>>
    %123 = vector.broadcast %122 : f32 to vector<1x128xf32>
    %124 = arith.addf %121, %123 : vector<1x128xf32>
    %c1_9 = arith.constant 1 : index
    %c0_10 = arith.constant 0 : index
    %c0_11 = arith.constant 0 : index
    %125 = vector.load %arg3[%c1_9, %c0_10, %c0_11] : memref<3x1x128xf32, #tpu.memory_space<vmem>>, vector<1x1x128xf32>
    %126 = vector.shape_cast %125 : vector<1x1x128xf32> to vector<1x128xf32>
    %127 = vector.shape_cast %124 : vector<1x128xf32> to vector<1x1x128xf32>
    tpu.vector_store %arg3[%c1_9, %c0_10, %c0_11], %127 {strides = array<i32>} : memref<3x1x128xf32, #tpu.memory_space<vmem>>, vector<1x1x128xf32>,
    %c20 = arith.constant 20 : index
    %128 = memref.load %arg1[%c20] : memref<39xf32, #tpu.memory_space<smem>>
    %129 = vector.broadcast %128 : f32 to vector<1x128xf32>
    %130 = arith.mulf %14, %129 : vector<1x128xf32>
    %c23 = arith.constant 23 : index
    %131 = memref.load %arg1[%c23] : memref<39xf32, #tpu.memory_space<smem>>
    %132 = vector.broadcast %131 : f32 to vector<1x128xf32>
    %133 = arith.mulf %25, %132 : vector<1x128xf32>
    %134 = arith.addf %130, %133 : vector<1x128xf32>
    %c26 = arith.constant 26 : index
    %135 = memref.load %arg1[%c26] : memref<39xf32, #tpu.memory_space<smem>>
    %136 = vector.broadcast %135 : f32 to vector<1x128xf32>
    %137 = arith.mulf %36, %136 : vector<1x128xf32>
    %138 = arith.addf %134, %137 : vector<1x128xf32>
    %c29 = arith.constant 29 : index
    %139 = memref.load %arg1[%c29] : memref<39xf32, #tpu.memory_space<smem>>
    %140 = vector.broadcast %139 : f32 to vector<1x128xf32>
    %141 = arith.mulf %47, %140 : vector<1x128xf32>
    %142 = arith.addf %138, %141 : vector<1x128xf32>
    %c32 = arith.constant 32 : index
    %143 = memref.load %arg1[%c32] : memref<39xf32, #tpu.memory_space<smem>>
    %144 = vector.broadcast %143 : f32 to vector<1x128xf32>
    %145 = arith.mulf %58, %144 : vector<1x128xf32>
    %146 = arith.addf %142, %145 : vector<1x128xf32>
    %c35 = arith.constant 35 : index
    %147 = memref.load %arg1[%c35] : memref<39xf32, #tpu.memory_space<smem>>
    %148 = vector.broadcast %147 : f32 to vector<1x128xf32>
    %149 = arith.mulf %69, %148 : vector<1x128xf32>
    %150 = arith.addf %146, %149 : vector<1x128xf32>
    %c38 = arith.constant 38 : index
    %151 = memref.load %arg1[%c38] : memref<39xf32, #tpu.memory_space<smem>>
    %152 = vector.broadcast %151 : f32 to vector<1x128xf32>
    %153 = arith.addf %150, %152 : vector<1x128xf32>
    %c2_12 = arith.constant 2 : index
    %c0_13 = arith.constant 0 : index
    %c0_14 = arith.constant 0 : index
    %154 = vector.load %arg3[%c2_12, %c0_13, %c0_14] : memref<3x1x128xf32, #tpu.memory_space<vmem>>, vector<1x1x128xf32>
    %155 = vector.shape_cast %154 : vector<1x1x128xf32> to vector<1x128xf32>
    %156 = vector.shape_cast %153 : vector<1x128xf32> to vector<1x1x128xf32>
    tpu.vector_store %arg3[%c2_12, %c0_13, %c0_14], %156 {strides = array<i32>} : memref<3x1x128xf32, #tpu.memory_space<vmem>>, vector<1x1x128xf32>,
    return
  }
  func.func @transform_0(%arg0: i32) -> i32 {
    %c0_i32 = arith.constant 0 : i32
    %c0_i32_0 = arith.constant 0 : i32
    return %c0_i32 : i32
  }
  func.func @transform_1(%arg0: i32) -> (i32, i32, i32) {
    %c0_i32 = arith.constant 0 : i32
    %c0_i32_0 = arith.constant 0 : i32
    %c0_i32_1 = arith.constant 0 : i32
    return %c0_i32, %arg0, %c0_i32_0 : i32, i32, i32
  }
  func.func @transform_2(%arg0: i32) -> (i32, i32, i32) {
    %c0_i32 = arith.constant 0 : i32
    %c0_i32_0 = arith.constant 0 : i32
    %c0_i32_1 = arith.constant 0 : i32
    return %c0_i32, %arg0, %c0_i32_0 : i32, i32, i32
  }
}

</mosaic_0001>

<llo_original>
// kernel: net_apply.1
$region0: #{net_apply.1}
  #allocation0 [shape = 'u32[]', space=smem, size = 0x4, offset = 0x4, fixed_abs, tag = 'smem constant byte address 0x4 - core index']
  #allocation1 [shape = 'u32[72,128]{1,0:T(1,128)}', space=vmem, size = 0x9000, scoped, tag = 'internal scratch']
  %s0 = inlined_call_operand.vmem [shape: f32[39], index: 0, kind: input, shape index: {}]
  %s1 = inlined_call_operand.vmem [shape: f32[2,1,128], index: 1, kind: input, shape index: {}]
  %s2 = inlined_call_operand.vmem [shape: f32[3,1,128], index: 2, kind: output, shape index: {}]
  %s3 = sld [smem:[#allocation0]]
  $region22: #{net_apply.1} parent=0
    _
  %s5 = ssub.s32 1, %s3
  %s6 = scalar_select 0, %s5, %s3
  $region1: #{net_apply.1} parent=0
    #allocation2 [shape = 'u8[512]{0}', space=smem, size = 0x200, scoped, tag = 'input window, operand 0, single buffered']
    #allocation3 [shape = 's32[1]{0}', space=sflag, size = 0x4, scoped, tag = 'scoped memory for net_apply.1']
    %7 = vsyncpa [#allocation3], 0
    // Predicated region
    $region2: #{net_apply.1} parent=1 // pred_check
      _
    $region3: #{net_apply.1} parent=1 // pred_check_branch
      %9 = sbr.rel (0) target = $region5
    $region4: #{net_apply.1} parent=1 // pred_region
      %11 = vsyncadd [#allocation3], 0
      %s13 = sshll.u32 %s0, 4
      %s14 = int_to_ptr.vmem [resolvable:$true] %s13
      %16 = dma.vmem_to_smem %s14, 16, [#allocation2], [#allocation3]
    $region5: #{net_apply.1} parent=1 // pred_fallthru
      _
    // Predicated region
    $region6: #{net_apply.1} parent=1 // pred_check
      _
    $region7: #{net_apply.1} parent=1 // pred_check_branch
      %18 = sbr.rel (0) target = $region9
    $region8: #{net_apply.1} parent=1 // pred_region
      _
    $region9: #{net_apply.1} parent=1 // pred_fallthru
      _
    // Predicated region
    $region10: #{net_apply.1} parent=1 // pred_check
      _
    $region11: #{net_apply.1} parent=1 // pred_check_branch
      %20 = sbr.rel (0) target = $region13
    $region12: #{net_apply.1} parent=1 // pred_region
      %22 = dma.done [#allocation3], 16
    $region13: #{net_apply.1} parent=1 // pred_fallthru
      _
    %23 = sfence
    %v24 = vld [vmem:[%s1] sm:$0x1]
    %s25 = scalar_lea.vmem %s1, 1
    %v26 = vld [vmem:[%s25] sm:$0x1]
    %s27 = sld [smem:[#allocation2]]
    %v28 = vstv %s27
    %v29 = vmul.f32 %v28, %v24
    %s30 = sld [smem:[#allocation2 + $0x6]]
    %v31 = vstv %s30
    %v32 = vmul.f32 %v31, %v26
    %v33 = vadd.f32 %v29, %v32
    %s34 = sld [smem:[#allocation2 + $0xc]]
    %v35 = vstv %s34
    %v36 = vadd.f32 %v33, %v35
    %v37 = vtanh.pop %v36
    %s38 = sld [smem:[#allocation2 + $0x1]]
    %v39 = vstv %s38
    %v40 = vmul.f32 %v39, %v24
    %s41 = sld [smem:[#allocation2 + $0x7]]
    %v42 = vstv %s41
    %v43 = vmul.f32 %v42, %v26
    %v44 = vadd.f32 %v40, %v43
    %s45 = sld [smem:[#allocation2 + $0xd]]
    %v46 = vstv %s45
    %v47 = vadd.f32 %v44, %v46
    %v48 = vtanh.pop %v47
    %s49 = sld [smem:[#allocation2 + $0x2]]
    %v50 = vstv %s49
    %v51 = vmul.f32 %v50, %v24
    %s52 = sld [smem:[#allocation2 + $0x8]]
    %v53 = vstv %s52
    %v54 = vmul.f32 %v53, %v26
    %v55 = vadd.f32 %v51, %v54
    %s56 = sld [smem:[#allocation2 + $0xe]]
    %v57 = vstv %s56
    %v58 = vadd.f32 %v55, %v57
    %v59 = vtanh.pop %v58
    %s60 = sld [smem:[#allocation2 + $0x3]]
    %v61 = vstv %s60
    %v62 = vmul.f32 %v61, %v24
    %s63 = sld [smem:[#allocation2 + $0x9]]
    %v64 = vstv %s63
    %v65 = vmul.f32 %v64, %v26
    %v66 = vadd.f32 %v62, %v65
    %s67 = sld [smem:[#allocation2 + $0xf]]
    %v68 = vstv %s67
    %v69 = vadd.f32 %v66, %v68
    %v70 = vtanh.pop %v69
    %s71 = sld [smem:[#allocation2 + $0x4]]
    %v72 = vstv %s71
    %v73 = vmul.f32 %v72, %v24
    %s74 = sld [smem:[#allocation2 + $0xa]]
    %v75 = vstv %s74
    %v76 = vmul.f32 %v75, %v26
    %v77 = vadd.f32 %v73, %v76
    %s78 = sld [smem:[#allocation2 + $0x10]]
    %v79 = vstv %s78
    %v80 = vadd.f32 %v77, %v79
    %v81 = vtanh.pop %v80
    %s82 = sld [smem:[#allocation2 + $0x5]]
    %v83 = vstv %s82
    %v84 = vmul.f32 %v83, %v24
    %s85 = sld [smem:[#allocation2 + $0xb]]
    %v86 = vstv %s85
    %v87 = vmul.f32 %v86, %v26
    %v88 = vadd.f32 %v84, %v87
    %s89 = sld [smem:[#allocation2 + $0x11]]
    %v90 = vstv %s89
    %v91 = vadd.f32 %v88, %v90
    %v92 = vtanh.pop %v91
    %s93 = sld [smem:[#allocation2 + $0x12]]
    %v94 = vstv %s93
    %v95 = vmul.f32 %v37, %v94
    %s96 = sld [smem:[#allocation2 + $0x15]]
    %v97 = vstv %s96
    %v98 = vmul.f32 %v48, %v97
    %v99 = vadd.f32 %v95, %v98
    %s100 = sld [smem:[#allocation2 + $0x18]]
    %v101 = vstv %s100
    %v102 = vmul.f32 %v59, %v101
    %v103 = vadd.f32 %v99, %v102
    %s104 = sld [smem:[#allocation2 + $0x1b]]
    %v105 = vstv %s104
    %v106 = vmul.f32 %v70, %v105
    %v107 = vadd.f32 %v103, %v106
    %s108 = sld [smem:[#allocation2 + $0x1e]]
    %v109 = vstv %s108
    %v110 = vmul.f32 %v81, %v109
    %v111 = vadd.f32 %v107, %v110
    %s112 = sld [smem:[#allocation2 + $0x21]]
    %v113 = vstv %s112
    %v114 = vmul.f32 %v92, %v113
    %v115 = vadd.f32 %v111, %v114
    %s116 = sld [smem:[#allocation2 + $0x24]]
    %v117 = vstv %s116
    %v118 = vadd.f32 %v115, %v117
    %119 = vst [vmem:[%s2] sm:$0x1] %v118
    %s120 = sld [smem:[#allocation2 + $0x13]]
    %v121 = vstv %s120
    %v122 = vmul.f32 %v37, %v121
    %s123 = sld [smem:[#allocation2 + $0x16]]
    %v124 = vstv %s123
    %v125 = vmul.f32 %v48, %v124
    %v126 = vadd.f32 %v122, %v125
    %s127 = sld [smem:[#allocation2 + $0x19]]
    %v128 = vstv %s127
    %v129 = vmul.f32 %v59, %v128
    %v130 = vadd.f32 %v126, %v129
    %s131 = sld [smem:[#allocation2 + $0x1c]]
    %v132 = vstv %s131
    %v133 = vmul.f32 %v70, %v132
    %v134 = vadd.f32 %v130, %v133
    %s135 = sld [smem:[#allocation2 + $0x1f]]
    %v136 = vstv %s135
    %v137 = vmul.f32 %v81, %v136
    %v138 = vadd.f32 %v134, %v137
    %s139 = sld [smem:[#allocation2 + $0x22]]
    %v140 = vstv %s139
    %v141 = vmul.f32 %v92, %v140
    %v142 = vadd.f32 %v138, %v141
    %s143 = sld [smem:[#allocation2 + $0x25]]
    %v144 = vstv %s143
    %v145 = vadd.f32 %v142, %v144
    %s146 = scalar_lea.vmem %s2, 1
    %147 = vst [vmem:[%s146] sm:$0x1] %v145
    %s148 = sld [smem:[#allocation2 + $0x14]]
    %v149 = vstv %s148
    %v150 = vmul.f32 %v37, %v149
    %s151 = sld [smem:[#allocation2 + $0x17]]
    %v152 = vstv %s151
    %v153 = vmul.f32 %v48, %v152
    %v154 = vadd.f32 %v150, %v153
    %s155 = sld [smem:[#allocation2 + $0x1a]]
    %v156 = vstv %s155
    %v157 = vmul.f32 %v59, %v156
    %v158 = vadd.f32 %v154, %v157
    %s159 = sld [smem:[#allocation2 + $0x1d]]
    %v160 = vstv %s159
    %v161 = vmul.f32 %v70, %v160
    %v162 = vadd.f32 %v158, %v161
    %s163 = sld [smem:[#allocation2 + $0x20]]
    %v164 = vstv %s163
    %v165 = vmul.f32 %v81, %v164
    %v166 = vadd.f32 %v162, %v165
    %s167 = sld [smem:[#allocation2 + $0x23]]
    %v168 = vstv %s167
    %v169 = vmul.f32 %v92, %v168
    %v170 = vadd.f32 %v166, %v169
    %s171 = sld [smem:[#allocation2 + $0x26]]
    %v172 = vstv %s171
    %v173 = vadd.f32 %v170, %v172
    %s174 = scalar_lea.vmem %s2, 2
    %175 = vst [vmem:[%s174] sm:$0x1] %v173
    // Predicated region
    $region14: #{net_apply.1} parent=1 // pred_check
      _
    $region15: #{net_apply.1} parent=1 // pred_check_branch
      %177 = sbr.rel (0) target = $region17
    $region16: #{net_apply.1} parent=1 // pred_region
      _
    $region17: #{net_apply.1} parent=1 // pred_fallthru
      _
    // Predicated region
    $region18: #{net_apply.1} parent=1 // pred_check
      _
    $region19: #{net_apply.1} parent=1 // pred_check_branch
      %179 = sbr.rel (0) target = $region21
    $region20: #{net_apply.1} parent=1 // pred_region
      _
    $region21: #{net_apply.1} parent=1 // pred_fallthru
      _
    %180 = vsyncpa [#allocation3], 1

</llo_original>
